<compile_context>
chip_gen: v7x
topology: tpu7x:2x2x1
jax: 0.10.0
libtpu: 0.0.40
codegen_flags: <defaults>
</compile_context>

<pallas_src>
import functools

import jax
import jax.numpy as jnp
from jax.experimental import pallas as pl
from jax.experimental.pallas import tpu as pltpu

_LANE = 128
_SUBLANE = 8


def _round_up(x, m):
    return (x + m - 1) // m * m


def _gcn_fused_kernel(n_layers, layer_dims, adj_ref, feat_ref, w_ref, b_ref, o_ref):
    """All GraphConv layers fused in a single kernel invocation.

    adj_ref : [NP, NP]     raw 0/1 adjacency (bf16, self-loops, zero-padded rows/cols)
    feat_ref: [NP, FP]     node features, zero-padded (bf16)
    w_ref   : [L, FP, FP]  zero-padded layer weights (bf16)
    b_ref   : [1, FP]      final-layer bias, zero-padded (f32)
    o_ref   : [NP, FP]     output (f32); caller slices [:n, :n_classes]
    """
    # --- degree normalization, done once in-kernel (A_norm never touches HBM) ---
    adj = adj_ref[...].astype(jnp.float32)                            # exact 0/1
    deg_in = jnp.maximum(jnp.sum(adj, axis=1, keepdims=True), 1.0)    # [NP, 1] dst in-degree
    deg_out = jnp.maximum(jnp.sum(adj, axis=0, keepdims=True), 1.0)   # [1, NP] src out-degree
    a_norm = (adj * jax.lax.rsqrt(deg_in) * jax.lax.rsqrt(deg_out)).astype(jnp.bfloat16)

    h = feat_ref[...]  # bf16; stays resident across layers
    for i in range(n_layers):
        w = w_ref[i]   # static index -> [FP, FP] bf16 tile
        f_in, f_out = layer_dims[i]
        # Reassociate the two matmuls from the *logical* feature dims so the
        # N^2-sized matmul always runs over the smaller feature dimension.
        if f_out < f_in:
            hw = jnp.dot(h, w, preferred_element_type=jnp.float32).astype(jnp.bfloat16)
            out = jnp.dot(a_norm, hw, preferred_element_type=jnp.float32)
        else:
            ah = jnp.dot(a_norm, h, preferred_element_type=jnp.float32).astype(jnp.bfloat16)
            out = jnp.dot(ah, w, preferred_element_type=jnp.float32)
        if i == n_layers - 1:
            # bias only exists on the final GraphConv layer
            o_ref[...] = (out + b_ref[...]).astype(o_ref.dtype)
        else:
            # ReLU; dropout / batchnorm are identity / unused at inference
            h = jnp.maximum(out, 0.0).astype(jnp.bfloat16)


@jax.jit
def gcn_forward(adj, feat, weights, bias_last):
    """Eval-mode forward of the GCN module (dropout == identity, use_linear=False)."""
    n, in_feats = feat.shape
    n_layers = len(weights)
    layer_dims = tuple((int(w.shape[0]), int(w.shape[1])) for w in weights)
    n_classes = layer_dims[-1][1]

    # Pad feature dims to 128 lanes and node count to 8 sublanes so every MXU
    # operand / store is dense and unmasked.  Zero padding contributes nothing
    # (padded nodes have degree 0 -> clamped to 1 -> zero rows in A_norm).
    fp = _round_up(max((in_feats,) + tuple(d for dd in layer_dims for d in dd)), _LANE)
    np_ = _round_up(n, _SUBLANE)

    adj_pad = jnp.zeros((np_, np_), jnp.bfloat16).at[:n, :n].set(adj.astype(jnp.bfloat16))
    feat_pad = jnp.zeros((np_, fp), jnp.bfloat16).at[:n, :in_feats].set(
        feat.astype(jnp.bfloat16))
    w_stack = jnp.zeros((n_layers, fp, fp), jnp.bfloat16)
    for i, w in enumerate(weights):
        w_stack = w_stack.at[i, : w.shape[0], : w.shape[1]].set(w.astype(jnp.bfloat16))
    b_pad = jnp.zeros((1, fp), jnp.float32).at[:, :n_classes].set(
        bias_last.reshape(1, -1).astype(jnp.float32))

    flops = sum(2 * np_ * np_ * fp + 2 * np_ * fp * fp for _ in range(n_layers))
    bytes_accessed = (adj_pad.size + feat_pad.size + w_stack.size) * 2 + (
        b_pad.size + np_ * fp) * 4

    kernel = functools.partial(_gcn_fused_kernel, n_layers, layer_dims)
    # At N=128 / FP=128 the whole problem (~130 KiB) fits in VMEM, so one
    # grid-less call with whole-array blocks is optimal.  For large N, add a
    # node-row grid over A / H / out with dimension_semantics=("parallel",) and
    # per-generation TILE_N (v7x: 64 MiB VMEM, 2 TCs; v5e/v6e: 128 MiB, 1 TC).
    out_pad = pl.pallas_call(
        kernel,
        out_shape=jax.ShapeDtypeStruct((np_, fp), jnp.float32),
        in_specs=[pl.BlockSpec(memory_space=pltpu.MemorySpace.VMEM)] * 4,
        out_specs=pl.BlockSpec(memory_space=pltpu.MemorySpace.VMEM),
        cost_estimate=pl.CostEstimate(flops=flops, transcendentals=0,
                                      bytes_accessed=bytes_accessed),
    )(adj_pad, feat_pad, w_stack, b_pad)
    return out_pad[:n, :n_classes]


def gcn_reference(adj, feat, weights, bias_last):
    """Plain-JAX f32 reference (DGL GraphConv norm='both', eval mode)."""
    deg_in = jnp.clip(jnp.sum(adj, axis=1), 1.0, None)
    deg_out = jnp.clip(jnp.sum(adj, axis=0), 1.0, None)
    a_norm = adj / jnp.sqrt(deg_in)[:, None] / jnp.sqrt(deg_out)[None, :]
    h = feat
    n_layers = len(weights)
    for i in range(n_layers):
        h = a_norm @ h @ weights[i]
        if i == n_layers - 1:
            h = h + bias_last.reshape(1, -1)
        else:
            h = jnp.maximum(h, 0.0)
    return h


def init_params(key, in_feats, n_hidden, n_classes, n_layers):
    """Xavier-uniform-ish init matching the module's layer shapes."""
    weights = []
    for i in range(n_layers):
        in_h = n_hidden if i > 0 else in_feats
        out_h = n_hidden if i < n_layers - 1 else n_classes
        key, wk = jax.random.split(key)
        limit = (6.0 / (in_h + out_h)) ** 0.5
        weights.append(
            jax.random.uniform(wk, (in_h, out_h), jnp.float32,
                               minval=-limit, maxval=limit))
    return weights


if __name__ == "__main__":
    N = 128          # number of graph nodes
    IN_FEATS = 32
    N_HIDDEN = 64
    N_CLASSES = 16
    N_LAYERS = 3

    key = jax.random.PRNGKey(0)
    k_adj, k_feat, k_params, k_bias = jax.random.split(key, 4)

    # Random symmetric adjacency with self-loops.
    rand_edges = jax.random.bernoulli(k_adj, 0.08, (N, N))
    adj = jnp.logical_or(rand_edges, rand_edges.T).astype(jnp.float32)
    adj = jnp.maximum(adj, jnp.eye(N, dtype=jnp.float32))

    feat = jax.random.normal(k_feat, (N, IN_FEATS), jnp.float32)

    weights = init_params(k_params, IN_FEATS, N_HIDDEN, N_CLASSES, N_LAYERS)
    # DGL initializes the GraphConv bias to zeros; use a small random bias here
    # so the final-layer bias-add path is actually exercised.
    bias_last = 0.1 * jax.random.normal(k_bias, (N_CLASSES,), jnp.float32)

    out = gcn_forward(adj, feat, weights, bias_last)
    out = jax.block_until_ready(out)

    assert out.shape == (N, N_CLASSES), out.shape
    assert bool(jnp.all(jnp.isfinite(out)))

    ref = gcn_reference(adj, feat, weights, bias_last)
    max_err = float(jnp.max(jnp.abs(out - ref)))
    assert jnp.allclose(out, ref, atol=0.1, rtol=0.1), max_err

    print("KERNEL_OK")
</pallas_src>

<mosaic_0001>
module attributes {stable_mosaic.version = 11 : i64} {
  func.func @_gcn_fused_kernel(%arg0: memref<128x128xbf16, #tpu.memory_space<vmem>>, %arg1: memref<128x128xbf16, #tpu.memory_space<vmem>>, %arg2: memref<3x128x128xbf16, #tpu.memory_space<vmem>>, %arg3: memref<1x128xf32, #tpu.memory_space<vmem>>, %arg4: memref<128x128xf32, #tpu.memory_space<vmem>>) attributes {dimension_semantics = [], scalar_prefetch = 0 : i64, scratch_operands = 0 : i64, tpu.core_type = #tpu.core_type<tc>} {
    %c0 = arith.constant 0 : index
    %c0_0 = arith.constant 0 : index
    %0 = vector.load %arg0[%c0, %c0_0] : memref<128x128xbf16, #tpu.memory_space<vmem>>, vector<128x128xbf16>
    %1 = arith.extf %0 : vector<128x128xbf16> to vector<128x128xf32>
    %cst = arith.constant dense<0.000000e+00> : vector<128xf32>
    %2 = vector.multi_reduction <add>, %1, %cst [1] : vector<128x128xf32> to vector<128xf32>
    %3 = vector.shape_cast %2 : vector<128xf32> to vector<128x1xf32>
    %cst_1 = arith.constant 1.000000e+00 : f32
    %4 = vector.broadcast %cst_1 : f32 to vector<128x1xf32>
    %5 = arith.maximumf %3, %4 : vector<128x1xf32>
    %cst_2 = arith.constant dense<0.000000e+00> : vector<128xf32>
    %6 = vector.multi_reduction <add>, %1, %cst_2 [0] : vector<128x128xf32> to vector<128xf32>
    %7 = vector.shape_cast %6 : vector<128xf32> to vector<1x128xf32>
    %cst_3 = arith.constant 1.000000e+00 : f32
    %8 = vector.broadcast %cst_3 : f32 to vector<1x128xf32>
    %9 = arith.maximumf %7, %8 : vector<1x128xf32>
    %10 = math.rsqrt %5 : vector<128x1xf32>
    %11 = vector.broadcast %10 : vector<128x1xf32> to vector<128x128xf32>
    %12 = arith.mulf %1, %11 : vector<128x128xf32>
    %13 = math.rsqrt %9 : vector<1x128xf32>
    %14 = vector.broadcast %13 : vector<1x128xf32> to vector<128x128xf32>
    %15 = arith.mulf %12, %14 : vector<128x128xf32>
    %16 = arith.truncf %15 : vector<128x128xf32> to vector<128x128xbf16>
    %c0_4 = arith.constant 0 : index
    %c0_5 = arith.constant 0 : index
    %17 = vector.load %arg1[%c0_4, %c0_5] : memref<128x128xbf16, #tpu.memory_space<vmem>>, vector<128x128xbf16>
    %c0_6 = arith.constant 0 : index
    %c0_7 = arith.constant 0 : index
    %c0_8 = arith.constant 0 : index
    %18 = vector.load %arg2[%c0_6, %c0_7, %c0_8] : memref<3x128x128xbf16, #tpu.memory_space<vmem>>, vector<1x128x128xbf16>
    %19 = vector.shape_cast %18 : vector<1x128x128xbf16> to vector<128x128xbf16>
    %cst_9 = arith.constant dense<0.000000e+00> : vector<128x128xf32>
    %20 = tpu.matmul %16, %17, %cst_9 {dimension_numbers = #tpu.dot_dimension_numbers<[1], [0], [0], [1], [0, 0, 1, 1], [], []>} : vector<128x128xbf16>, vector<128x128xbf16>, vector<128x128xf32> -> vector<128x128xf32>
    %21 = arith.truncf %20 : vector<128x128xf32> to vector<128x128xbf16>
    %cst_10 = arith.constant dense<0.000000e+00> : vector<128x128xf32>
    %22 = tpu.matmul %21, %19, %cst_10 {dimension_numbers = #tpu.dot_dimension_numbers<[1], [0], [0], [1], [0, 0, 1, 1], [], []>} : vector<128x128xbf16>, vector<128x128xbf16>, vector<128x128xf32> -> vector<128x128xf32>
    %cst_11 = arith.constant 0.000000e+00 : f32
    %23 = vector.broadcast %cst_11 : f32 to vector<128x128xf32>
    %24 = arith.maximumf %22, %23 : vector<128x128xf32>
    %25 = arith.truncf %24 : vector<128x128xf32> to vector<128x128xbf16>
    %c1 = arith.constant 1 : index
    %c0_12 = arith.constant 0 : index
    %c0_13 = arith.constant 0 : index
    %26 = vector.load %arg2[%c1, %c0_12, %c0_13] : memref<3x128x128xbf16, #tpu.memory_space<vmem>>, vector<1x128x128xbf16>
    %27 = vector.shape_cast %26 : vector<1x128x128xbf16> to vector<128x128xbf16>
    %cst_14 = arith.constant dense<0.000000e+00> : vector<128x128xf32>
    %28 = tpu.matmul %16, %25, %cst_14 {dimension_numbers = #tpu.dot_dimension_numbers<[1], [0], [0], [1], [0, 0, 1, 1], [], []>} : vector<128x128xbf16>, vector<128x128xbf16>, vector<128x128xf32> -> vector<128x128xf32>
    %29 = arith.truncf %28 : vector<128x128xf32> to vector<128x128xbf16>
    %cst_15 = arith.constant dense<0.000000e+00> : vector<128x128xf32>
    %30 = tpu.matmul %29, %27, %cst_15 {dimension_numbers = #tpu.dot_dimension_numbers<[1], [0], [0], [1], [0, 0, 1, 1], [], []>} : vector<128x128xbf16>, vector<128x128xbf16>, vector<128x128xf32> -> vector<128x128xf32>
    %cst_16 = arith.constant 0.000000e+00 : f32
    %31 = vector.broadcast %cst_16 : f32 to vector<128x128xf32>
    %32 = arith.maximumf %30, %31 : vector<128x128xf32>
    %33 = arith.truncf %32 : vector<128x128xf32> to vector<128x128xbf16>
    %c2 = arith.constant 2 : index
    %c0_17 = arith.constant 0 : index
    %c0_18 = arith.constant 0 : index
    %34 = vector.load %arg2[%c2, %c0_17, %c0_18] : memref<3x128x128xbf16, #tpu.memory_space<vmem>>, vector<1x128x128xbf16>
    %35 = vector.shape_cast %34 : vector<1x128x128xbf16> to vector<128x128xbf16>
    %cst_19 = arith.constant dense<0.000000e+00> : vector<128x128xf32>
    %36 = tpu.matmul %33, %35, %cst_19 {dimension_numbers = #tpu.dot_dimension_numbers<[1], [0], [0], [1], [0, 0, 1, 1], [], []>} : vector<128x128xbf16>, vector<128x128xbf16>, vector<128x128xf32> -> vector<128x128xf32>
    %37 = arith.truncf %36 : vector<128x128xf32> to vector<128x128xbf16>
    %cst_20 = arith.constant dense<0.000000e+00> : vector<128x128xf32>
    %38 = tpu.matmul %16, %37, %cst_20 {dimension_numbers = #tpu.dot_dimension_numbers<[1], [0], [0], [1], [0, 0, 1, 1], [], []>} : vector<128x128xbf16>, vector<128x128xbf16>, vector<128x128xf32> -> vector<128x128xf32>
    %c0_21 = arith.constant 0 : index
    %c0_22 = arith.constant 0 : index
    %39 = vector.load %arg3[%c0_21, %c0_22] : memref<1x128xf32, #tpu.memory_space<vmem>>, vector<1x128xf32>
    %40 = vector.broadcast %39 : vector<1x128xf32> to vector<128x128xf32>
    %41 = arith.addf %38, %40 : vector<128x128xf32>
    %c0_23 = arith.constant 0 : index
    %c0_24 = arith.constant 0 : index
    %42 = vector.load %arg4[%c0_23, %c0_24] : memref<128x128xf32, #tpu.memory_space<vmem>>, vector<128x128xf32>
    tpu.vector_store %arg4[%c0_23, %c0_24], %41 {strides = array<i32>} : memref<128x128xf32, #tpu.memory_space<vmem>>, vector<128x128xf32>,
    return
  }
}

</mosaic_0001>

<llo_original>
// kernel: gcn_forward.1
$region0: #{gcn_forward.1}
  #allocation0 [shape = 'u32[]', space=smem, size = 0x4, offset = 0x4, fixed_abs, tag = 'smem constant byte address 0x4 - core index']
  #allocation1 [shape = 'u32[144,128]{1,0:T(1,128)}', space=vmem, size = 0x12000, scoped, tag = 'internal scratch']
  %s0 = inlined_call_operand.vmem [shape: bf16[128,128], index: 0, kind: input, shape index: {}]
  %s1 = inlined_call_operand.vmem [shape: bf16[128,128], index: 1, kind: input, shape index: {}]
  %s2 = inlined_call_operand.vmem [shape: bf16[3,128,128], index: 2, kind: input, shape index: {}]
  %s3 = inlined_call_operand.vmem [shape: f32[1,128], index: 3, kind: input, shape index: {}]
  %s4 = inlined_call_operand.vmem [shape: f32[128,128], index: 4, kind: output, shape index: {}]
  %s5 = sld [smem:[#allocation0]]
  $region26: #{gcn_forward.1} parent=0
    _
  %s7 = ssub.s32 1, %s5
  %s8 = scalar_select 0, %s7, %s5
  // Predicated region
  $region2: #{gcn_forward.1} parent=0 // pred_check
    _
  $region3: #{gcn_forward.1} parent=0 // pred_check_branch
    %10 = sbr.rel (0) target = $region5
  $region4: #{gcn_forward.1} parent=0 // pred_region
    _
  $region5: #{gcn_forward.1} parent=0 // pred_fallthru
    _
  // Predicated region
  $region6: #{gcn_forward.1} parent=0 // pred_check
    _
  $region7: #{gcn_forward.1} parent=0 // pred_check_branch
    %12 = sbr.rel (0) target = $region9
  $region8: #{gcn_forward.1} parent=0 // pred_region
    _
  $region9: #{gcn_forward.1} parent=0 // pred_fallthru
    _
  // Predicated region
  $region10: #{gcn_forward.1} parent=0 // pred_check
    _
  $region11: #{gcn_forward.1} parent=0 // pred_check_branch
    %14 = sbr.rel (0) target = $region13
  $region12: #{gcn_forward.1} parent=0 // pred_region
    _
  $region13: #{gcn_forward.1} parent=0 // pred_fallthru
    _
  // Predicated region
  $region14: #{gcn_forward.1} parent=0 // pred_check
    _
  $region15: #{gcn_forward.1} parent=0 // pred_check_branch
    %16 = sbr.rel (0) target = $region17
  $region16: #{gcn_forward.1} parent=0 // pred_region
    _
  $region17: #{gcn_forward.1} parent=0 // pred_fallthru
    _
  %v18 = vld [vmem:[%s0] sm:$0xf]
  %v19 = vld [vmem:[%s0 + $0x4] sm:$0xf]
  %v20 = vld [vmem:[%s0 + $0x8] sm:$0xf]
  %v21 = vld [vmem:[%s0 + $0xc] sm:$0xf]
  %v22 = vld [vmem:[%s0 + $0x10] sm:$0xf]
  %v23 = vld [vmem:[%s0 + $0x14] sm:$0xf]
  %v24 = vld [vmem:[%s0 + $0x18] sm:$0xf]
  %v25 = vld [vmem:[%s0 + $0x1c] sm:$0xf]
  %v26 = vld [vmem:[%s0 + $0x20] sm:$0xf]
  %v27 = vld [vmem:[%s0 + $0x24] sm:$0xf]
  %v28 = vld [vmem:[%s0 + $0x28] sm:$0xf]
  %v29 = vld [vmem:[%s0 + $0x2c] sm:$0xf]
  %v30 = vld [vmem:[%s0 + $0x30] sm:$0xf]
  %v31 = vld [vmem:[%s0 + $0x34] sm:$0xf]
  %v32 = vld [vmem:[%s0 + $0x38] sm:$0xf]
  %v33 = vld [vmem:[%s0 + $0x3c] sm:$0xf]
  %v34 = vunpack.c.l.bf16 %v18
  %v35 = vunpack.c.l.bf16 %v19
  %v36 = vunpack.c.l.bf16 %v20
  %v37 = vunpack.c.l.bf16 %v21
  %v38 = vunpack.c.l.bf16 %v22
  %v39 = vunpack.c.l.bf16 %v23
  %v40 = vunpack.c.l.bf16 %v24
  %v41 = vunpack.c.l.bf16 %v25
  %v42 = vunpack.c.l.bf16 %v26
  %v43 = vunpack.c.l.bf16 %v27
  %v44 = vunpack.c.l.bf16 %v28
  %v45 = vunpack.c.l.bf16 %v29
  %v46 = vunpack.c.l.bf16 %v30
  %v47 = vunpack.c.l.bf16 %v31
  %v48 = vunpack.c.l.bf16 %v32
  %v49 = vunpack.c.l.bf16 %v33
  %50 = vadd.xlane.f32.xlu0 %v34
  %v51 = vpop.xlane.xlu0 %50
  %52 = vadd.xlane.f32.xlu0 %v35
  %v53 = vpop.xlane.xlu0 %52
  %54 = vadd.xlane.f32.xlu0 %v36
  %v55 = vpop.xlane.xlu0 %54
  %56 = vadd.xlane.f32.xlu0 %v37
  %v57 = vpop.xlane.xlu0 %56
  %58 = vadd.xlane.f32.xlu0 %v38
  %v59 = vpop.xlane.xlu0 %58
  %60 = vadd.xlane.f32.xlu0 %v39
  %v61 = vpop.xlane.xlu0 %60
  %62 = vadd.xlane.f32.xlu0 %v40
  %v63 = vpop.xlane.xlu0 %62
  %64 = vadd.xlane.f32.xlu0 %v41
  %v65 = vpop.xlane.xlu0 %64
  %66 = vadd.xlane.f32.xlu0 %v42
  %v67 = vpop.xlane.xlu0 %66
  %68 = vadd.xlane.f32.xlu0 %v43
  %v69 = vpop.xlane.xlu0 %68
  %70 = vadd.xlane.f32.xlu0 %v44
  %v71 = vpop.xlane.xlu0 %70
  %72 = vadd.xlane.f32.xlu0 %v45
  %v73 = vpop.xlane.xlu0 %72
  %74 = vadd.xlane.f32.xlu0 %v46
  %v75 = vpop.xlane.xlu0 %74
  %76 = vadd.xlane.f32.xlu0 %v47
  %v77 = vpop.xlane.xlu0 %76
  %78 = vadd.xlane.f32.xlu0 %v48
  %v79 = vpop.xlane.xlu0 %78
  %80 = vadd.xlane.f32.xlu0 %v49
  %v81 = vpop.xlane.xlu0 %80
  %v82 = vmax.f32 %v51, 1.0
  %v83 = vmax.f32 %v53, 1.0
  %v84 = vmax.f32 %v55, 1.0
  %v85 = vmax.f32 %v57, 1.0
  %v86 = vmax.f32 %v59, 1.0
  %v87 = vmax.f32 %v61, 1.0
  %v88 = vmax.f32 %v63, 1.0
  %v89 = vmax.f32 %v65, 1.0
  %v90 = vmax.f32 %v67, 1.0
  %v91 = vmax.f32 %v69, 1.0
  %v92 = vmax.f32 %v71, 1.0
  %v93 = vmax.f32 %v73, 1.0
  %v94 = vmax.f32 %v75, 1.0
  %v95 = vmax.f32 %v77, 1.0
  %v96 = vmax.f32 %v79, 1.0
  %v97 = vmax.f32 %v81, 1.0
  %v98 = vadd.f32 %v34, %v35
  %v99 = vadd.f32 %v98, %v36
  %v100 = vadd.f32 %v99, %v37
  %v101 = vadd.f32 %v100, %v38
  %v102 = vadd.f32 %v101, %v39
  %v103 = vadd.f32 %v102, %v40
  %v104 = vadd.f32 %v103, %v41
  %v105 = vadd.f32 %v104, %v42
  %v106 = vadd.f32 %v105, %v43
  %v107 = vadd.f32 %v106, %v44
  %v108 = vadd.f32 %v107, %v45
  %v109 = vadd.f32 %v108, %v46
  %v110 = vadd.f32 %v109, %v47
  %v111 = vadd.f32 %v110, %v48
  %v112 = vadd.f32 %v111, %v49
  %v113 = vrot.slane %v112, 4
  %v114 = vadd.f32 %v112, %v113
  %v115 = vrot.slane %v114, 2
  %v116 = vadd.f32 %v114, %v115
  %v117 = vrot.slane %v116, 1
  %v118 = vadd.f32 %v116, %v117
  %v119 = vmax.f32 %v118, 1.0
  %v120 = vrsqrt.pop %v82
  %v121 = vrsqrt.pop %v83
  %v122 = vrsqrt.pop %v84
  %v123 = vrsqrt.pop %v85
  %v124 = vrsqrt.pop %v86
  %v125 = vrsqrt.pop %v87
  %v126 = vrsqrt.pop %v88
  %v127 = vrsqrt.pop %v89
  %v128 = vrsqrt.pop %v90
  %v129 = vrsqrt.pop %v91
  %v130 = vrsqrt.pop %v92
  %v131 = vrsqrt.pop %v93
  %v132 = vrsqrt.pop %v94
  %v133 = vrsqrt.pop %v95
  %v134 = vrsqrt.pop %v96
  %v135 = vrsqrt.pop %v97
  %v136 = vmul.f32 %v34, %v120
  %v137 = vmul.f32 %v35, %v121
  %v138 = vmul.f32 %v36, %v122
  %v139 = vmul.f32 %v37, %v123
  %v140 = vmul.f32 %v38, %v124
  %v141 = vmul.f32 %v39, %v125
  %v142 = vmul.f32 %v40, %v126
  %v143 = vmul.f32 %v41, %v127
  %v144 = vmul.f32 %v42, %v128
  %v145 = vmul.f32 %v43, %v129
  %v146 = vmul.f32 %v44, %v130
  %v147 = vmul.f32 %v45, %v131
  %v148 = vmul.f32 %v46, %v132
  %v149 = vmul.f32 %v47, %v133
  %v150 = vmul.f32 %v48, %v134
  %v151 = vmul.f32 %v49, %v135
  %v152 = vrsqrt.pop %v119
  %v153 = vmul.f32 %v136, %v152
  %v154 = vmul.f32 %v137, %v152
  %v155 = vmul.f32 %v138, %v152
  %v156 = vmul.f32 %v139, %v152
  %v157 = vmul.f32 %v140, %v152
  %v158 = vmul.f32 %v141, %v152
  %v159 = vmul.f32 %v142, %v152
  %v160 = vmul.f32 %v143, %v152
  %v161 = vmul.f32 %v144, %v152
  %v162 = vmul.f32 %v145, %v152
  %v163 = vmul.f32 %v146, %v152
  %v164 = vmul.f32 %v147, %v152
  %v165 = vmul.f32 %v148, %v152
  %v166 = vmul.f32 %v149, %v152
  %v167 = vmul.f32 %v150, %v152
  %v168 = vmul.f32 %v151, %v152
  %v169 = vpack.c.bf16 %v154, %v153
  %v170 = vpack.c.bf16 %v156, %v155
  %v171 = vpack.c.bf16 %v158, %v157
  %v172 = vpack.c.bf16 %v160, %v159
  %v173 = vpack.c.bf16 %v162, %v161
  %v174 = vpack.c.bf16 %v164, %v163
  %v175 = vpack.c.bf16 %v166, %v165
  %v176 = vpack.c.bf16 %v168, %v167
  %v177 = vld [vmem:[%s1] sm:$0xf]
  %v178 = vld [vmem:[%s1 + $0x4] sm:$0xf]
  %v179 = vld [vmem:[%s1 + $0x8] sm:$0xf]
  %v180 = vld [vmem:[%s1 + $0xc] sm:$0xf]
  %v181 = vld [vmem:[%s1 + $0x10] sm:$0xf]
  %v182 = vld [vmem:[%s1 + $0x14] sm:$0xf]
  %v183 = vld [vmem:[%s1 + $0x18] sm:$0xf]
  %v184 = vld [vmem:[%s1 + $0x1c] sm:$0xf]
  %v185 = vld [vmem:[%s1 + $0x20] sm:$0xf]
  %v186 = vld [vmem:[%s1 + $0x24] sm:$0xf]
  %v187 = vld [vmem:[%s1 + $0x28] sm:$0xf]
  %v188 = vld [vmem:[%s1 + $0x2c] sm:$0xf]
  %v189 = vld [vmem:[%s1 + $0x30] sm:$0xf]
  %v190 = vld [vmem:[%s1 + $0x34] sm:$0xf]
  %v191 = vld [vmem:[%s1 + $0x38] sm:$0xf]
  %v192 = vld [vmem:[%s1 + $0x3c] sm:$0xf]
  %v193 = vld [vmem:[%s2] sm:$0xf]
  %v194 = vld [vmem:[%s2 + $0x4] sm:$0xf]
  %v195 = vld [vmem:[%s2 + $0x8] sm:$0xf]
  %v196 = vld [vmem:[%s2 + $0xc] sm:$0xf]
  %v197 = vld [vmem:[%s2 + $0x10] sm:$0xf]
  %v198 = vld [vmem:[%s2 + $0x14] sm:$0xf]
  %v199 = vld [vmem:[%s2 + $0x18] sm:$0xf]
  %v200 = vld [vmem:[%s2 + $0x1c] sm:$0xf]
  %v201 = vld [vmem:[%s2 + $0x20] sm:$0xf]
  %v202 = vld [vmem:[%s2 + $0x24] sm:$0xf]
  %v203 = vld [vmem:[%s2 + $0x28] sm:$0xf]
  %v204 = vld [vmem:[%s2 + $0x2c] sm:$0xf]
  %v205 = vld [vmem:[%s2 + $0x30] sm:$0xf]
  %v206 = vld [vmem:[%s2 + $0x34] sm:$0xf]
  %v207 = vld [vmem:[%s2 + $0x38] sm:$0xf]
  %v208 = vld [vmem:[%s2 + $0x3c] sm:$0xf]
  %v225 = vunpack.c.l.b16 %v177
  %v226 = vunpack.c.l.b16 %v178
  %v227 = vunpack.c.l.b16 %v179
  %v228 = vunpack.c.l.b16 %v180
  %v229 = vunpack.c.l.b16 %v181
  %v230 = vunpack.c.l.b16 %v182
  %v231 = vunpack.c.l.b16 %v183
  %v232 = vunpack.c.l.b16 %v184
  %v233 = vunpack.c.l.b16 %v185
  %v234 = vunpack.c.l.b16 %v186
  %v235 = vunpack.c.l.b16 %v187
  %v236 = vunpack.c.l.b16 %v188
  %v237 = vunpack.c.l.b16 %v189
  %v238 = vunpack.c.l.b16 %v190
  %v239 = vunpack.c.l.b16 %v191
  %v240 = vunpack.c.l.b16 %v192
  %v241 = vpack.c.b16 %v226, %v225
  %v242 = vpack.c.b16 %v228, %v227
  %v243 = vpack.c.b16 %v230, %v229
  %v244 = vpack.c.b16 %v232, %v231
  %v245 = vpack.c.b16 %v234, %v233
  %v246 = vpack.c.b16 %v236, %v235
  %v247 = vpack.c.b16 %v238, %v237
  %v248 = vpack.c.b16 %v240, %v239
  %257 = vmatprep.subr.bf16.mxu0 0
  %258 = vmatpush1.bf16.msra.mxu0 %v241
  %259 = vmatprep.subr.bf16.mxu0 0
  %260 = vmatpush1.bf16.msra.mxu0 %v242
  %261 = vmatprep.subr.bf16.mxu0 0
  %262 = vmatpush1.bf16.msra.mxu0 %v243
  %263 = vmatprep.subr.bf16.mxu0 0
  %264 = vmatpush1.bf16.msra.mxu0 %v244
  %265 = vmatprep.subr.bf16.mxu0 0
  %266 = vmatpush1.bf16.msra.mxu0 %v245
  %267 = vmatprep.subr.bf16.mxu0 0
  %268 = vmatpush1.bf16.msra.mxu0 %v246
  %269 = vmatprep.subr.bf16.mxu0 0
  %270 = vmatpush1.bf16.msra.mxu0 %v247
  %271 = vmatprep.subr.bf16.mxu0 0
  %272 = vmatpush1.bf16.msra.mxu0 %v248
  %273 = vmatprep.subr.bf16.mxu0 0
  %274 = vmatpush1.bf16.msra.mxu0 0
  %275 = vmatprep.subr.bf16.mxu0 0
  %276 = vmatpush1.bf16.msra.mxu0 0
  %277 = vmatprep.subr.bf16.mxu0 0
  %278 = vmatpush1.bf16.msra.mxu0 0
  %279 = vmatprep.subr.bf16.mxu0 0
  %280 = vmatpush1.bf16.msra.mxu0 0
  %281 = vmatprep.subr.bf16.mxu0 0
  %282 = vmatpush1.bf16.msra.mxu0 0
  %283 = vmatprep.subr.bf16.mxu0 0
  %284 = vmatpush1.bf16.msra.mxu0 0
  %285 = vmatprep.subr.bf16.mxu0 0
  %286 = vmatpush1.bf16.msra.mxu0 0
  %287 = vmatprep.subr.bf16.mxu0 0
  %288 = vmatpush1.bf16.msra.mxu0 0
  %289 = vmatprep.mubr.bf16.mxu0 0
  %290 = vmatmul.mubr.bf16.gmra.mrb[0].mxu0 %v169
  %v291 = vpop.f32.mrb[0].mxu0
  %v292 = vadd.f32 0.0, %v291
  %v293 = vpop.f32.mrb[0].mxu0
  %v294 = vpop.f32.mrb[0].mxu0
  %v295 = vadd.f32 0.0, %v294
  %v296 = vpop.f32.mrb[0].mxu0
  %297 = vmatprep.mubr.bf16.mxu0 0
  %298 = vmatmul.mubr.bf16.gmra.mrb[0].mxu0 %v170
  %v299 = vpop.f32.mrb[0].mxu0
  %v300 = vadd.f32 0.0, %v299
  %v301 = vpop.f32.mrb[0].mxu0
  %v302 = vpop.f32.mrb[0].mxu0
  %v303 = vadd.f32 0.0, %v302
  %v304 = vpop.f32.mrb[0].mxu0
  %305 = vmatprep.mubr.bf16.mxu0 0
  %306 = vmatmul.mubr.bf16.gmra.mrb[0].mxu0 %v171
  %v307 = vpop.f32.mrb[0].mxu0
  %v308 = vadd.f32 0.0, %v307
  %v309 = vpop.f32.mrb[0].mxu0
  %v310 = vpop.f32.mrb[0].mxu0
  %v311 = vadd.f32 0.0, %v310
  %v312 = vpop.f32.mrb[0].mxu0
  %313 = vmatprep.mubr.bf16.mxu0 0
  %314 = vmatmul.mubr.bf16.gmra.mrb[0].mxu0 %v172
  %v315 = vpop.f32.mrb[0].mxu0
  %v316 = vadd.f32 0.0, %v315
  %v317 = vpop.f32.mrb[0].mxu0
  %v318 = vpop.f32.mrb[0].mxu0
  %v319 = vadd.f32 0.0, %v318
  %v320 = vpop.f32.mrb[0].mxu0
  %321 = vmatprep.mubr.bf16.mxu0 0
  %322 = vmatmul.mubr.bf16.gmra.mrb[0].mxu0 %v173
  %v323 = vpop.f32.mrb[0].mxu0
  %v324 = vadd.f32 0.0, %v323
  %v325 = vpop.f32.mrb[0].mxu0
  %v326 = vpop.f32.mrb[0].mxu0
  %v327 = vadd.f32 0.0, %v326
  %v328 = vpop.f32.mrb[0].mxu0
  %329 = vmatprep.mubr.bf16.mxu0 0
  %330 = vmatmul.mubr.bf16.gmra.mrb[0].mxu0 %v174
  %v331 = vpop.f32.mrb[0].mxu0
  %v332 = vadd.f32 0.0, %v331
  %v333 = vpop.f32.mrb[0].mxu0
  %v334 = vpop.f32.mrb[0].mxu0
  %v335 = vadd.f32 0.0, %v334
  %v336 = vpop.f32.mrb[0].mxu0
  %337 = vmatprep.mubr.bf16.mxu0 0
  %338 = vmatmul.mubr.bf16.gmra.mrb[0].mxu0 %v175
  %v339 = vpop.f32.mrb[0].mxu0
  %v340 = vadd.f32 0.0, %v339
  %v341 = vpop.f32.mrb[0].mxu0
  %v342 = vpop.f32.mrb[0].mxu0
  %v343 = vadd.f32 0.0, %v342
  %v344 = vpop.f32.mrb[0].mxu0
  %345 = vmatprep.mubr.bf16.mxu0 0
  %346 = vmatmul.mubr.bf16.gmra.mrb[0].mxu0 %v176
  %v347 = vpop.f32.mrb[0].mxu0
  %v348 = vadd.f32 0.0, %v347
  %v349 = vpop.f32.mrb[0].mxu0
  %v350 = vpop.f32.mrb[0].mxu0
  %v351 = vadd.f32 0.0, %v350
  %v352 = vpop.f32.mrb[0].mxu0
  %353 = vdwg.mxu0
  %v354 = vpack.c.bf16 %v295, %v292
  %v355 = vpack.c.bf16 %v303, %v300
  %v356 = vpack.c.bf16 %v311, %v308
  %v357 = vpack.c.bf16 %v319, %v316
  %v358 = vpack.c.bf16 %v327, %v324
  %v359 = vpack.c.bf16 %v335, %v332
  %v360 = vpack.c.bf16 %v343, %v340
  %v361 = vpack.c.bf16 %v351, %v348
  %v378 = vunpack.c.l.b16 %v193
  %v379 = vunpack.c.l.b16 %v194
  %v380 = vunpack.c.l.b16 %v195
  %v381 = vunpack.c.l.b16 %v196
  %v382 = vunpack.c.l.b16 %v197
  %v383 = vunpack.c.l.b16 %v198
  %v384 = vunpack.c.l.b16 %v199
  %v385 = vunpack.c.l.b16 %v200
  %v386 = vunpack.c.l.b16 %v201
  %v387 = vunpack.c.l.b16 %v202
  %v388 = vunpack.c.l.b16 %v203
  %v389 = vunpack.c.l.b16 %v204
  %v390 = vunpack.c.l.b16 %v205
  %v391 = vunpack.c.l.b16 %v206
  %v392 = vunpack.c.l.b16 %v207
  %v393 = vunpack.c.l.b16 %v208
  %v394 = vpack.c.b16 %v379, %v378
  %v395 = vpack.c.b16 %v381, %v380
  %v396 = vpack.c.b16 %v383, %v382
  %v397 = vpack.c.b16 %v385, %v384
  %v398 = vpack.c.b16 %v387, %v386
  %v399 = vpack.c.b16 %v389, %v388
  %v400 = vpack.c.b16 %v391, %v390
  %v401 = vpack.c.b16 %v393, %v392
  %410 = vmatprep.subr.bf16.mxu0 0
  %411 = vmatpush1.bf16.msra.mxu0 %v394
  %412 = vmatprep.subr.bf16.mxu0 0
  %413 = vmatpush1.bf16.msra.mxu0 %v395
  %414 = vmatprep.subr.bf16.mxu0 0
  %415 = vmatpush1.bf16.msra.mxu0 %v396
  %416 = vmatprep.subr.bf16.mxu0 0
  %417 = vmatpush1.bf16.msra.mxu0 %v397
  %418 = vmatprep.subr.bf16.mxu0 0
  %419 = vmatpush1.bf16.msra.mxu0 %v398
  %420 = vmatprep.subr.bf16.mxu0 0
  %421 = vmatpush1.bf16.msra.mxu0 %v399
  %422 = vmatprep.subr.bf16.mxu0 0
  %423 = vmatpush1.bf16.msra.mxu0 %v400
  %424 = vmatprep.subr.bf16.mxu0 0
  %425 = vmatpush1.bf16.msra.mxu0 %v401
  %426 = vmatprep.subr.bf16.mxu0 0
  %427 = vmatpush1.bf16.msra.mxu0 0
  %428 = vmatprep.subr.bf16.mxu0 0
  %429 = vmatpush1.bf16.msra.mxu0 0
  %430 = vmatprep.subr.bf16.mxu0 0
  %431 = vmatpush1.bf16.msra.mxu0 0
  %432 = vmatprep.subr.bf16.mxu0 0
  %433 = vmatpush1.bf16.msra.mxu0 0
  %434 = vmatprep.subr.bf16.mxu0 0
  %435 = vmatpush1.bf16.msra.mxu0 0
  %436 = vmatprep.subr.bf16.mxu0 0
  %437 = vmatpush1.bf16.msra.mxu0 0
  %438 = vmatprep.subr.bf16.mxu0 0
  %439 = vmatpush1.bf16.msra.mxu0 0
  %440 = vmatprep.subr.bf16.mxu0 0
  %441 = vmatpush1.bf16.msra.mxu0 0
  %442 = vmatprep.mubr.bf16.mxu0 0
  %443 = vmatmul.mubr.bf16.gmra.mrb[0].mxu0 %v354
  %v444 = vpop.f32.mrb[0].mxu0
  %v445 = vadd.f32 0.0, %v444
  %v446 = vpop.f32.mrb[0].mxu0
  %v447 = vpop.f32.mrb[0].mxu0
  %v448 = vadd.f32 0.0, %v447
  %v449 = vpop.f32.mrb[0].mxu0
  %450 = vmatprep.mubr.bf16.mxu0 0
  %451 = vmatmul.mubr.bf16.gmra.mrb[0].mxu0 %v355
  %v452 = vpop.f32.mrb[0].mxu0
  %v453 = vadd.f32 0.0, %v452
  %v454 = vpop.f32.mrb[0].mxu0
  %v455 = vpop.f32.mrb[0].mxu0
  %v456 = vadd.f32 0.0, %v455
  %v457 = vpop.f32.mrb[0].mxu0
  %458 = vmatprep.mubr.bf16.mxu0 0
  %459 = vmatmul.mubr.bf16.gmra.mrb[0].mxu0 %v356
  %v460 = vpop.f32.mrb[0].mxu0
  %v461 = vadd.f32 0.0, %v460
  %v462 = vpop.f32.mrb[0].mxu0
  %v463 = vpop.f32.mrb[0].mxu0
  %v464 = vadd.f32 0.0, %v463
  %v465 = vpop.f32.mrb[0].mxu0
  %466 = vmatprep.mubr.bf16.mxu0 0
  %467 = vmatmul.mubr.bf16.gmra.mrb[0].mxu0 %v357
  %v468 = vpop.f32.mrb[0].mxu0
  %v469 = vadd.f32 0.0, %v468
  %v470 = vpop.f32.mrb[0].mxu0
  %v471 = vpop.f32.mrb[0].mxu0
  %v472 = vadd.f32 0.0, %v471
  %v473 = vpop.f32.mrb[0].mxu0
  %474 = vmatprep.mubr.bf16.mxu0 0
  %475 = vmatmul.mubr.bf16.gmra.mrb[0].mxu0 %v358
  %v476 = vpop.f32.mrb[0].mxu0
  %v477 = vadd.f32 0.0, %v476
  %v478 = vpop.f32.mrb[0].mxu0
  %v479 = vpop.f32.mrb[0].mxu0
  %v480 = vadd.f32 0.0, %v479
  %v481 = vpop.f32.mrb[0].mxu0
  %482 = vmatprep.mubr.bf16.mxu0 0
  %483 = vmatmul.mubr.bf16.gmra.mrb[0].mxu0 %v359
  %v484 = vpop.f32.mrb[0].mxu0
  %v485 = vadd.f32 0.0, %v484
  %v486 = vpop.f32.mrb[0].mxu0
  %v487 = vpop.f32.mrb[0].mxu0
  %v488 = vadd.f32 0.0, %v487
  %v489 = vpop.f32.mrb[0].mxu0
  %490 = vmatprep.mubr.bf16.mxu0 0
  %491 = vmatmul.mubr.bf16.gmra.mrb[0].mxu0 %v360
  %v492 = vpop.f32.mrb[0].mxu0
  %v493 = vadd.f32 0.0, %v492
  %v494 = vpop.f32.mrb[0].mxu0
  %v495 = vpop.f32.mrb[0].mxu0
  %v496 = vadd.f32 0.0, %v495
  %v497 = vpop.f32.mrb[0].mxu0
  %498 = vmatprep.mubr.bf16.mxu0 0
  %499 = vmatmul.mubr.bf16.gmra.mrb[0].mxu0 %v361
  %v500 = vpop.f32.mrb[0].mxu0
  %v501 = vadd.f32 0.0, %v500
  %v502 = vpop.f32.mrb[0].mxu0
  %v503 = vpop.f32.mrb[0].mxu0
  %v504 = vadd.f32 0.0, %v503
  %v505 = vpop.f32.mrb[0].mxu0
  %506 = vdwg.mxu0
  %v507 = vmax.f32 %v445, 0.0
  %v508 = vmax.f32 %v448, 0.0
  %v509 = vmax.f32 %v453, 0.0
  %v510 = vmax.f32 %v456, 0.0
  %v511 = vmax.f32 %v461, 0.0
  %v512 = vmax.f32 %v464, 0.0
  %v513 = vmax.f32 %v469, 0.0
  %v514 = vmax.f32 %v472, 0.0
  %v515 = vmax.f32 %v477, 0.0
  %v516 = vmax.f32 %v480, 0.0
  %v517 = vmax.f32 %v485, 0.0
  %v518 = vmax.f32 %v488, 0.0
  %v519 = vmax.f32 %v493, 0.0
  %v520 = vmax.f32 %v496, 0.0
  %v521 = vmax.f32 %v501, 0.0
  %v522 = vmax.f32 %v504, 0.0
  %v523 = vpack.c.bf16 %v508, %v507
  %v524 = vpack.c.bf16 %v510, %v509
  %v525 = vpack.c.bf16 %v512, %v511
  %v526 = vpack.c.bf16 %v514, %v513
  %v527 = vpack.c.bf16 %v516, %v515
  %v528 = vpack.c.bf16 %v518, %v517
  %v529 = vpack.c.bf16 %v520, %v519
  %v530 = vpack.c.bf16 %v522, %v521
  %s531 = scalar_lea.vmem %s2, 64
  %v532 = vld [vmem:[%s531] sm:$0xf]
  %v533 = vld [vmem:[%s531 + $0x4] sm:$0xf]
  %v534 = vld [vmem:[%s531 + $0x8] sm:$0xf]
  %v535 = vld [vmem:[%s531 + $0xc] sm:$0xf]
  %v536 = vld [vmem:[%s531 + $0x10] sm:$0xf]
  %v537 = vld [vmem:[%s531 + $0x14] sm:$0xf]
  %v538 = vld [vmem:[%s531 + $0x18] sm:$0xf]
  %v539 = vld [vmem:[%s531 + $0x1c] sm:$0xf]
  %v540 = vld [vmem:[%s531 + $0x20] sm:$0xf]
  %v541 = vld [vmem:[%s531 + $0x24] sm:$0xf]
  %v542 = vld [vmem:[%s531 + $0x28] sm:$0xf]
  %v543 = vld [vmem:[%s531 + $0x2c] sm:$0xf]
  %v544 = vld [vmem:[%s531 + $0x30] sm:$0xf]
  %v545 = vld [vmem:[%s531 + $0x34] sm:$0xf]
  %v546 = vld [vmem:[%s531 + $0x38] sm:$0xf]
  %v547 = vld [vmem:[%s531 + $0x3c] sm:$0xf]
  %548 = vmatprep.subr.bf16.mxu0 0
  %549 = vmatpush1.bf16.msra.mxu0 %v523
  %550 = vmatprep.subr.bf16.mxu0 0
  %551 = vmatpush1.bf16.msra.mxu0 %v524
  %552 = vmatprep.subr.bf16.mxu0 0
  %553 = vmatpush1.bf16.msra.mxu0 %v525
  %554 = vmatprep.subr.bf16.mxu0 0
  %555 = vmatpush1.bf16.msra.mxu0 %v526
  %556 = vmatprep.subr.bf16.mxu0 0
  %557 = vmatpush1.bf16.msra.mxu0 %v527
  %558 = vmatprep.subr.bf16.mxu0 0
  %559 = vmatpush1.bf16.msra.mxu0 %v528
  %560 = vmatprep.subr.bf16.mxu0 0
  %561 = vmatpush1.bf16.msra.mxu0 %v529
  %562 = vmatprep.subr.bf16.mxu0 0
  %563 = vmatpush1.bf16.msra.mxu0 %v530
  %564 = vmatprep.subr.bf16.mxu0 0
  %565 = vmatpush1.bf16.msra.mxu0 0
  %566 = vmatprep.subr.bf16.mxu0 0
  %567 = vmatpush1.bf16.msra.mxu0 0
  %568 = vmatprep.subr.bf16.mxu0 0
  %569 = vmatpush1.bf16.msra.mxu0 0
  %570 = vmatprep.subr.bf16.mxu0 0
  %571 = vmatpush1.bf16.msra.mxu0 0
  %572 = vmatprep.subr.bf16.mxu0 0
  %573 = vmatpush1.bf16.msra.mxu0 0
  %574 = vmatprep.subr.bf16.mxu0 0
  %575 = vmatpush1.bf16.msra.mxu0 0
  %576 = vmatprep.subr.bf16.mxu0 0
  %577 = vmatpush1.bf16.msra.mxu0 0
  %578 = vmatprep.subr.bf16.mxu0 0
  %579 = vmatpush1.bf16.msra.mxu0 0
  %580 = vmatprep.mubr.bf16.mxu0 0
  %581 = vmatmul.mubr.bf16.gmra.mrb[0].mxu0 %v169
  %v582 = vpop.f32.mrb[0].mxu0
  %v583 = vadd.f32 0.0, %v582
  %v584 = vpop.f32.mrb[0].mxu0
  %v585 = vpop.f32.mrb[0].mxu0
  %v586 = vadd.f32 0.0, %v585
  %v587 = vpop.f32.mrb[0].mxu0
  %588 = vmatprep.mubr.bf16.mxu0 0
  %589 = vmatmul.mubr.bf16.gmra.mrb[0].mxu0 %v170
  %v590 = vpop.f32.mrb[0].mxu0
  %v591 = vadd.f32 0.0, %v590
  %v592 = vpop.f32.mrb[0].mxu0
  %v593 = vpop.f32.mrb[0].mxu0
  %v594 = vadd.f32 0.0, %v593
  %v595 = vpop.f32.mrb[0].mxu0
  %596 = vmatprep.mubr.bf16.mxu0 0
  %597 = vmatmul.mubr.bf16.gmra.mrb[0].mxu0 %v171
  %v598 = vpop.f32.mrb[0].mxu0
  %v599 = vadd.f32 0.0, %v598
  %v600 = vpop.f32.mrb[0].mxu0
  %v601 = vpop.f32.mrb[0].mxu0
  %v602 = vadd.f32 0.0, %v601
  %v603 = vpop.f32.mrb[0].mxu0
  %604 = vmatprep.mubr.bf16.mxu0 0
  %605 = vmatmul.mubr.bf16.gmra.mrb[0].mxu0 %v172
  %v606 = vpop.f32.mrb[0].mxu0
  %v607 = vadd.f32 0.0, %v606
  %v608 = vpop.f32.mrb[0].mxu0
  %v609 = vpop.f32.mrb[0].mxu0
  %v610 = vadd.f32 0.0, %v609
  %v611 = vpop.f32.mrb[0].mxu0
  %612 = vmatprep.mubr.bf16.mxu0 0
  %613 = vmatmul.mubr.bf16.gmra.mrb[0].mxu0 %v173
  %v614 = vpop.f32.mrb[0].mxu0
  %v615 = vadd.f32 0.0, %v614
  %v616 = vpop.f32.mrb[0].mxu0
  %v617 = vpop.f32.mrb[0].mxu0
  %v618 = vadd.f32 0.0, %v617
  %v619 = vpop.f32.mrb[0].mxu0
  %620 = vmatprep.mubr.bf16.mxu0 0
  %621 = vmatmul.mubr.bf16.gmra.mrb[0].mxu0 %v174
  %v622 = vpop.f32.mrb[0].mxu0
  %v623 = vadd.f32 0.0, %v622
  %v624 = vpop.f32.mrb[0].mxu0
  %v625 = vpop.f32.mrb[0].mxu0
  %v626 = vadd.f32 0.0, %v625
  %v627 = vpop.f32.mrb[0].mxu0
  %628 = vmatprep.mubr.bf16.mxu0 0
  %629 = vmatmul.mubr.bf16.gmra.mrb[0].mxu0 %v175
  %v630 = vpop.f32.mrb[0].mxu0
  %v631 = vadd.f32 0.0, %v630
  %v632 = vpop.f32.mrb[0].mxu0
  %v633 = vpop.f32.mrb[0].mxu0
  %v634 = vadd.f32 0.0, %v633
  %v635 = vpop.f32.mrb[0].mxu0
  %636 = vmatprep.mubr.bf16.mxu0 0
  %637 = vmatmul.mubr.bf16.gmra.mrb[0].mxu0 %v176
  %v638 = vpop.f32.mrb[0].mxu0
  %v639 = vadd.f32 0.0, %v638
  %v640 = vpop.f32.mrb[0].mxu0
  %v641 = vpop.f32.mrb[0].mxu0
  %v642 = vadd.f32 0.0, %v641
  %v643 = vpop.f32.mrb[0].mxu0
  %644 = vdwg.mxu0
  %v645 = vpack.c.bf16 %v586, %v583
  %v646 = vpack.c.bf16 %v594, %v591
  %v647 = vpack.c.bf16 %v602, %v599
  %v648 = vpack.c.bf16 %v610, %v607
  %v649 = vpack.c.bf16 %v618, %v615
  %v650 = vpack.c.bf16 %v626, %v623
  %v651 = vpack.c.bf16 %v634, %v631
  %v652 = vpack.c.bf16 %v642, %v639
  %v669 = vunpack.c.l.b16 %v532
  %v670 = vunpack.c.l.b16 %v533
  %v671 = vunpack.c.l.b16 %v534
  %v672 = vunpack.c.l.b16 %v535
  %v673 = vunpack.c.l.b16 %v536
  %v674 = vunpack.c.l.b16 %v537
  %v675 = vunpack.c.l.b16 %v538
  %v676 = vunpack.c.l.b16 %v539
  %v677 = vunpack.c.l.b16 %v540
  %v678 = vunpack.c.l.b16 %v541
  %v679 = vunpack.c.l.b16 %v542
  %v680 = vunpack.c.l.b16 %v543
  %v681 = vunpack.c.l.b16 %v544
  %v682 = vunpack.c.l.b16 %v545
  %v683 = vunpack.c.l.b16 %v546
  %v684 = vunpack.c.l.b16 %v547
  %v685 = vpack.c.b16 %v670, %v669
  %v686 = vpack.c.b16 %v672, %v671
  %v687 = vpack.c.b16 %v674, %v673
  %v688 = vpack.c.b16 %v676, %v675
  %v689 = vpack.c.b16 %v678, %v677
  %v690 = vpack.c.b16 %v680, %v679
  %v691 = vpack.c.b16 %v682, %v681
  %v692 = vpack.c.b16 %v684, %v683
  %701 = vmatprep.subr.bf16.mxu0 0
  %702 = vmatpush1.bf16.msra.mxu0 %v685
  %703 = vmatprep.subr.bf16.mxu0 0
  %704 = vmatpush1.bf16.msra.mxu0 %v686
  %705 = vmatprep.subr.bf16.mxu0 0
  %706 = vmatpush1.bf16.msra.mxu0 %v687
  %707 = vmatprep.subr.bf16.mxu0 0
  %708 = vmatpush1.bf16.msra.mxu0 %v688
  %709 = vmatprep.subr.bf16.mxu0 0
  %710 = vmatpush1.bf16.msra.mxu0 %v689
  %711 = vmatprep.subr.bf16.mxu0 0
  %712 = vmatpush1.bf16.msra.mxu0 %v690
  %713 = vmatprep.subr.bf16.mxu0 0
  %714 = vmatpush1.bf16.msra.mxu0 %v691
  %715 = vmatprep.subr.bf16.mxu0 0
  %716 = vmatpush1.bf16.msra.mxu0 %v692
  %717 = vmatprep.subr.bf16.mxu0 0
  %718 = vmatpush1.bf16.msra.mxu0 0
  %719 = vmatprep.subr.bf16.mxu0 0
  %720 = vmatpush1.bf16.msra.mxu0 0
  %721 = vmatprep.subr.bf16.mxu0 0
  %722 = vmatpush1.bf16.msra.mxu0 0
  %723 = vmatprep.subr.bf16.mxu0 0
  %724 = vmatpush1.bf16.msra.mxu0 0
  %725 = vmatprep.subr.bf16.mxu0 0
  %726 = vmatpush1.bf16.msra.mxu0 0
  %727 = vmatprep.subr.bf16.mxu0 0
  %728 = vmatpush1.bf16.msra.mxu0 0
  %729 = vmatprep.subr.bf16.mxu0 0
  %730 = vmatpush1.bf16.msra.mxu0 0
  %731 = vmatprep.subr.bf16.mxu0 0
  %732 = vmatpush1.bf16.msra.mxu0 0
  %733 = vmatprep.mubr.bf16.mxu0 0
  %734 = vmatmul.mubr.bf16.gmra.mrb[0].mxu0 %v645
  %v735 = vpop.f32.mrb[0].mxu0
  %v736 = vadd.f32 0.0, %v735
  %v737 = vpop.f32.mrb[0].mxu0
  %v738 = vpop.f32.mrb[0].mxu0
  %v739 = vadd.f32 0.0, %v738
  %v740 = vpop.f32.mrb[0].mxu0
  %741 = vmatprep.mubr.bf16.mxu0 0
  %742 = vmatmul.mubr.bf16.gmra.mrb[0].mxu0 %v646
  %v743 = vpop.f32.mrb[0].mxu0
  %v744 = vadd.f32 0.0, %v743
  %v745 = vpop.f32.mrb[0].mxu0
  %v746 = vpop.f32.mrb[0].mxu0
  %v747 = vadd.f32 0.0, %v746
  %v748 = vpop.f32.mrb[0].mxu0
  %749 = vmatprep.mubr.bf16.mxu0 0
  %750 = vmatmul.mubr.bf16.gmra.mrb[0].mxu0 %v647
  %v751 = vpop.f32.mrb[0].mxu0
  %v752 = vadd.f32 0.0, %v751
  %v753 = vpop.f32.mrb[0].mxu0
  %v754 = vpop.f32.mrb[0].mxu0
  %v755 = vadd.f32 0.0, %v754
  %v756 = vpop.f32.mrb[0].mxu0
  %757 = vmatprep.mubr.bf16.mxu0 0
  %758 = vmatmul.mubr.bf16.gmra.mrb[0].mxu0 %v648
  %v759 = vpop.f32.mrb[0].mxu0
  %v760 = vadd.f32 0.0, %v759
  %v761 = vpop.f32.mrb[0].mxu0
  %v762 = vpop.f32.mrb[0].mxu0
  %v763 = vadd.f32 0.0, %v762
  %v764 = vpop.f32.mrb[0].mxu0
  %765 = vmatprep.mubr.bf16.mxu0 0
  %766 = vmatmul.mubr.bf16.gmra.mrb[0].mxu0 %v649
  %v767 = vpop.f32.mrb[0].mxu0
  %v768 = vadd.f32 0.0, %v767
  %v769 = vpop.f32.mrb[0].mxu0
  %v770 = vpop.f32.mrb[0].mxu0
  %v771 = vadd.f32 0.0, %v770
  %v772 = vpop.f32.mrb[0].mxu0
  %773 = vmatprep.mubr.bf16.mxu0 0
  %774 = vmatmul.mubr.bf16.gmra.mrb[0].mxu0 %v650
  %v775 = vpop.f32.mrb[0].mxu0
  %v776 = vadd.f32 0.0, %v775
  %v777 = vpop.f32.mrb[0].mxu0
  %v778 = vpop.f32.mrb[0].mxu0
  %v779 = vadd.f32 0.0, %v778
  %v780 = vpop.f32.mrb[0].mxu0
  %781 = vmatprep.mubr.bf16.mxu0 0
  %782 = vmatmul.mubr.bf16.gmra.mrb[0].mxu0 %v651
  %v783 = vpop.f32.mrb[0].mxu0
  %v784 = vadd.f32 0.0, %v783
  %v785 = vpop.f32.mrb[0].mxu0
  %v786 = vpop.f32.mrb[0].mxu0
  %v787 = vadd.f32 0.0, %v786
  %v788 = vpop.f32.mrb[0].mxu0
  %789 = vmatprep.mubr.bf16.mxu0 0
  %790 = vmatmul.mubr.bf16.gmra.mrb[0].mxu0 %v652
  %v791 = vpop.f32.mrb[0].mxu0
  %v792 = vadd.f32 0.0, %v791
  %v793 = vpop.f32.mrb[0].mxu0
  %v794 = vpop.f32.mrb[0].mxu0
  %v795 = vadd.f32 0.0, %v794
  %v796 = vpop.f32.mrb[0].mxu0
  %797 = vdwg.mxu0
  %v798 = vmax.f32 %v736, 0.0
  %v799 = vmax.f32 %v739, 0.0
  %v800 = vmax.f32 %v744, 0.0
  %v801 = vmax.f32 %v747, 0.0
  %v802 = vmax.f32 %v752, 0.0
  %v803 = vmax.f32 %v755, 0.0
  %v804 = vmax.f32 %v760, 0.0
  %v805 = vmax.f32 %v763, 0.0
  %v806 = vmax.f32 %v768, 0.0
  %v807 = vmax.f32 %v771, 0.0
  %v808 = vmax.f32 %v776, 0.0
  %v809 = vmax.f32 %v779, 0.0
  %v810 = vmax.f32 %v784, 0.0
  %v811 = vmax.f32 %v787, 0.0
  %v812 = vmax.f32 %v792, 0.0
  %v813 = vmax.f32 %v795, 0.0
  %v814 = vpack.c.bf16 %v799, %v798
  %v815 = vpack.c.bf16 %v801, %v800
  %v816 = vpack.c.bf16 %v803, %v802
  %v817 = vpack.c.bf16 %v805, %v804
  %v818 = vpack.c.bf16 %v807, %v806
  %v819 = vpack.c.bf16 %v809, %v808
  %v820 = vpack.c.bf16 %v811, %v810
  %v821 = vpack.c.bf16 %v813, %v812
  %s822 = scalar_lea.vmem %s2, 128
  %v823 = vld [vmem:[%s822] sm:$0xf]
  %v824 = vld [vmem:[%s822 + $0x4] sm:$0xf]
  %v825 = vld [vmem:[%s822 + $0x8] sm:$0xf]
  %v826 = vld [vmem:[%s822 + $0xc] sm:$0xf]
  %v827 = vld [vmem:[%s822 + $0x10] sm:$0xf]
  %v828 = vld [vmem:[%s822 + $0x14] sm:$0xf]
  %v829 = vld [vmem:[%s822 + $0x18] sm:$0xf]
  %v830 = vld [vmem:[%s822 + $0x1c] sm:$0xf]
  %v831 = vld [vmem:[%s822 + $0x20] sm:$0xf]
  %v832 = vld [vmem:[%s822 + $0x24] sm:$0xf]
  %v833 = vld [vmem:[%s822 + $0x28] sm:$0xf]
  %v834 = vld [vmem:[%s822 + $0x2c] sm:$0xf]
  %v835 = vld [vmem:[%s822 + $0x30] sm:$0xf]
  %v836 = vld [vmem:[%s822 + $0x34] sm:$0xf]
  %v837 = vld [vmem:[%s822 + $0x38] sm:$0xf]
  %v838 = vld [vmem:[%s822 + $0x3c] sm:$0xf]
  %v855 = vunpack.c.l.b16 %v823
  %v856 = vunpack.c.l.b16 %v824
  %v857 = vunpack.c.l.b16 %v825
  %v858 = vunpack.c.l.b16 %v826
  %v859 = vunpack.c.l.b16 %v827
  %v860 = vunpack.c.l.b16 %v828
  %v861 = vunpack.c.l.b16 %v829
  %v862 = vunpack.c.l.b16 %v830
  %v863 = vunpack.c.l.b16 %v831
  %v864 = vunpack.c.l.b16 %v832
  %v865 = vunpack.c.l.b16 %v833
  %v866 = vunpack.c.l.b16 %v834
  %v867 = vunpack.c.l.b16 %v835
  %v868 = vunpack.c.l.b16 %v836
  %v869 = vunpack.c.l.b16 %v837
  %v870 = vunpack.c.l.b16 %v838
  %v871 = vpack.c.b16 %v856, %v855
  %v872 = vpack.c.b16 %v858, %v857
  %v873 = vpack.c.b16 %v860, %v859
  %v874 = vpack.c.b16 %v862, %v861
  %v875 = vpack.c.b16 %v864, %v863
  %v876 = vpack.c.b16 %v866, %v865
  %v877 = vpack.c.b16 %v868, %v867
  %v878 = vpack.c.b16 %v870, %v869
  %887 = vmatprep.subr.bf16.mxu0 0
  %888 = vmatpush1.bf16.msra.mxu0 %v871
  %889 = vmatprep.subr.bf16.mxu0 0
  %890 = vmatpush1.bf16.msra.mxu0 %v872
  %891 = vmatprep.subr.bf16.mxu0 0
  %892 = vmatpush1.bf16.msra.mxu0 %v873
  %893 = vmatprep.subr.bf16.mxu0 0
  %894 = vmatpush1.bf16.msra.mxu0 %v874
  %895 = vmatprep.subr.bf16.mxu0 0
  %896 = vmatpush1.bf16.msra.mxu0 %v875
  %897 = vmatprep.subr.bf16.mxu0 0
  %898 = vmatpush1.bf16.msra.mxu0 %v876
  %899 = vmatprep.subr.bf16.mxu0 0
  %900 = vmatpush1.bf16.msra.mxu0 %v877
  %901 = vmatprep.subr.bf16.mxu0 0
  %902 = vmatpush1.bf16.msra.mxu0 %v878
  %903 = vmatprep.subr.bf16.mxu0 0
  %904 = vmatpush1.bf16.msra.mxu0 0
  %905 = vmatprep.subr.bf16.mxu0 0
  %906 = vmatpush1.bf16.msra.mxu0 0
  %907 = vmatprep.subr.bf16.mxu0 0
  %908 = vmatpush1.bf16.msra.mxu0 0
  %909 = vmatprep.subr.bf16.mxu0 0
  %910 = vmatpush1.bf16.msra.mxu0 0
  %911 = vmatprep.subr.bf16.mxu0 0
  %912 = vmatpush1.bf16.msra.mxu0 0
  %913 = vmatprep.subr.bf16.mxu0 0
  %914 = vmatpush1.bf16.msra.mxu0 0
  %915 = vmatprep.subr.bf16.mxu0 0
  %916 = vmatpush1.bf16.msra.mxu0 0
  %917 = vmatprep.subr.bf16.mxu0 0
  %918 = vmatpush1.bf16.msra.mxu0 0
  %919 = vmatprep.mubr.bf16.mxu0 0
  %920 = vmatmul.mubr.bf16.gmra.mrb[0].mxu0 %v814
  %v921 = vpop.f32.mrb[0].mxu0
  %v922 = vadd.f32 0.0, %v921
  %v923 = vpop.f32.mrb[0].mxu0
  %v924 = vpop.f32.mrb[0].mxu0
  %v925 = vadd.f32 0.0, %v924
  %v926 = vpop.f32.mrb[0].mxu0
  %927 = vmatprep.mubr.bf16.mxu0 0
  %928 = vmatmul.mubr.bf16.gmra.mrb[0].mxu0 %v815
  %v929 = vpop.f32.mrb[0].mxu0
  %v930 = vadd.f32 0.0, %v929
  %v931 = vpop.f32.mrb[0].mxu0
  %v932 = vpop.f32.mrb[0].mxu0
  %v933 = vadd.f32 0.0, %v932
  %v934 = vpop.f32.mrb[0].mxu0
  %935 = vmatprep.mubr.bf16.mxu0 0
  %936 = vmatmul.mubr.bf16.gmra.mrb[0].mxu0 %v816
  %v937 = vpop.f32.mrb[0].mxu0
  %v938 = vadd.f32 0.0, %v937
  %v939 = vpop.f32.mrb[0].mxu0
  %v940 = vpop.f32.mrb[0].mxu0
  %v941 = vadd.f32 0.0, %v940
  %v942 = vpop.f32.mrb[0].mxu0
  %943 = vmatprep.mubr.bf16.mxu0 0
  %944 = vmatmul.mubr.bf16.gmra.mrb[0].mxu0 %v817
  %v945 = vpop.f32.mrb[0].mxu0
  %v946 = vadd.f32 0.0, %v945
  %v947 = vpop.f32.mrb[0].mxu0
  %v948 = vpop.f32.mrb[0].mxu0
  %v949 = vadd.f32 0.0, %v948
  %v950 = vpop.f32.mrb[0].mxu0
  %951 = vmatprep.mubr.bf16.mxu0 0
  %952 = vmatmul.mubr.bf16.gmra.mrb[0].mxu0 %v818
  %v953 = vpop.f32.mrb[0].mxu0
  %v954 = vadd.f32 0.0, %v953
  %v955 = vpop.f32.mrb[0].mxu0
  %v956 = vpop.f32.mrb[0].mxu0
  %v957 = vadd.f32 0.0, %v956
  %v958 = vpop.f32.mrb[0].mxu0
  %959 = vmatprep.mubr.bf16.mxu0 0
  %960 = vmatmul.mubr.bf16.gmra.mrb[0].mxu0 %v819
  %v961 = vpop.f32.mrb[0].mxu0
  %v962 = vadd.f32 0.0, %v961
  %v963 = vpop.f32.mrb[0].mxu0
  %v964 = vpop.f32.mrb[0].mxu0
  %v965 = vadd.f32 0.0, %v964
  %v966 = vpop.f32.mrb[0].mxu0
  %967 = vmatprep.mubr.bf16.mxu0 0
  %968 = vmatmul.mubr.bf16.gmra.mrb[0].mxu0 %v820
  %v969 = vpop.f32.mrb[0].mxu0
  %v970 = vadd.f32 0.0, %v969
  %v971 = vpop.f32.mrb[0].mxu0
  %v972 = vpop.f32.mrb[0].mxu0
  %v973 = vadd.f32 0.0, %v972
  %v974 = vpop.f32.mrb[0].mxu0
  %975 = vmatprep.mubr.bf16.mxu0 0
  %976 = vmatmul.mubr.bf16.gmra.mrb[0].mxu0 %v821
  %v977 = vpop.f32.mrb[0].mxu0
  %v978 = vadd.f32 0.0, %v977
  %v979 = vpop.f32.mrb[0].mxu0
  %v980 = vpop.f32.mrb[0].mxu0
  %v981 = vadd.f32 0.0, %v980
  %v982 = vpop.f32.mrb[0].mxu0
  %983 = vdwg.mxu0
  %v984 = vpack.c.bf16 %v925, %v922
  %v985 = vpack.c.bf16 %v933, %v930
  %v986 = vpack.c.bf16 %v941, %v938
  %v987 = vpack.c.bf16 %v949, %v946
  %v988 = vpack.c.bf16 %v957, %v954
  %v989 = vpack.c.bf16 %v965, %v962
  %v990 = vpack.c.bf16 %v973, %v970
  %v991 = vpack.c.bf16 %v981, %v978
  %v992 = vld [vmem:[%s3] sm:$0x1]
  %v994 = vlaneseq
  %v995 = vshrl.u32 %v994, 7
  %v996 = vsub.s32 0, %v995
  %v997 = vrot.slane %v992, %v996
  %999 = vmatprep.subr.bf16.mxu0 0
  %1000 = vmatpush1.bf16.msra.mxu0 %v984
  %1001 = vmatprep.subr.bf16.mxu0 0
  %1002 = vmatpush1.bf16.msra.mxu0 %v985
  %1003 = vmatprep.subr.bf16.mxu0 0
  %1004 = vmatpush1.bf16.msra.mxu0 %v986
  %1005 = vmatprep.subr.bf16.mxu0 0
  %1006 = vmatpush1.bf16.msra.mxu0 %v987
  %1007 = vmatprep.subr.bf16.mxu0 0
  %1008 = vmatpush1.bf16.msra.mxu0 %v988
  %1009 = vmatprep.subr.bf16.mxu0 0
  %1010 = vmatpush1.bf16.msra.mxu0 %v989
  %1011 = vmatprep.subr.bf16.mxu0 0
  %1012 = vmatpush1.bf16.msra.mxu0 %v990
  %1013 = vmatprep.subr.bf16.mxu0 0
  %1014 = vmatpush1.bf16.msra.mxu0 %v991
  %1015 = vmatprep.subr.bf16.mxu0 0
  %1016 = vmatpush1.bf16.msra.mxu0 0
  %1017 = vmatprep.subr.bf16.mxu0 0
  %1018 = vmatpush1.bf16.msra.mxu0 0
  %1019 = vmatprep.subr.bf16.mxu0 0
  %1020 = vmatpush1.bf16.msra.mxu0 0
  %1021 = vmatprep.subr.bf16.mxu0 0
  %1022 = vmatpush1.bf16.msra.mxu0 0
  %1023 = vmatprep.subr.bf16.mxu0 0
  %1024 = vmatpush1.bf16.msra.mxu0 0
  %1025 = vmatprep.subr.bf16.mxu0 0
  %1026 = vmatpush1.bf16.msra.mxu0 0
  %1027 = vmatprep.subr.bf16.mxu0 0
  %1028 = vmatpush1.bf16.msra.mxu0 0
  %1029 = vmatprep.subr.bf16.mxu0 0
  %1030 = vmatpush1.bf16.msra.mxu0 0
  %1031 = vmatprep.mubr.bf16.mxu0 0
  %1032 = vmatmul.mubr.bf16.gmra.mrb[0].mxu0 %v169
  %v1033 = vpop.f32.mrb[0].mxu0
  %v1034 = vadd.f32 %v997, %v1033
  %v1035 = vpop.f32.mrb[0].mxu0
  %v1036 = vpop.f32.mrb[0].mxu0
  %v1037 = vadd.f32 %v997, %v1036
  %v1038 = vpop.f32.mrb[0].mxu0
  %1039 = vmatprep.mubr.bf16.mxu0 0
  %1040 = vmatmul.mubr.bf16.gmra.mrb[0].mxu0 %v170
  %v1041 = vpop.f32.mrb[0].mxu0
  %v1042 = vadd.f32 %v997, %v1041
  %v1043 = vpop.f32.mrb[0].mxu0
  %v1044 = vpop.f32.mrb[0].mxu0
  %v1045 = vadd.f32 %v997, %v1044
  %v1046 = vpop.f32.mrb[0].mxu0
  %1047 = vmatprep.mubr.bf16.mxu0 0
  %1048 = vmatmul.mubr.bf16.gmra.mrb[0].mxu0 %v171
  %v1049 = vpop.f32.mrb[0].mxu0
  %v1050 = vadd.f32 %v997, %v1049
  %v1051 = vpop.f32.mrb[0].mxu0
  %v1052 = vpop.f32.mrb[0].mxu0
  %v1053 = vadd.f32 %v997, %v1052
  %v1054 = vpop.f32.mrb[0].mxu0
  %1055 = vmatprep.mubr.bf16.mxu0 0
  %1056 = vmatmul.mubr.bf16.gmra.mrb[0].mxu0 %v172
  %v1057 = vpop.f32.mrb[0].mxu0
  %v1058 = vadd.f32 %v997, %v1057
  %v1059 = vpop.f32.mrb[0].mxu0
  %v1060 = vpop.f32.mrb[0].mxu0
  %v1061 = vadd.f32 %v997, %v1060
  %v1062 = vpop.f32.mrb[0].mxu0
  %1063 = vmatprep.mubr.bf16.mxu0 0
  %1064 = vmatmul.mubr.bf16.gmra.mrb[0].mxu0 %v173
  %v1065 = vpop.f32.mrb[0].mxu0
  %v1066 = vadd.f32 %v997, %v1065
  %v1067 = vpop.f32.mrb[0].mxu0
  %v1068 = vpop.f32.mrb[0].mxu0
  %v1069 = vadd.f32 %v997, %v1068
  %v1070 = vpop.f32.mrb[0].mxu0
  %1071 = vmatprep.mubr.bf16.mxu0 0
  %1072 = vmatmul.mubr.bf16.gmra.mrb[0].mxu0 %v174
  %v1073 = vpop.f32.mrb[0].mxu0
  %v1074 = vadd.f32 %v997, %v1073
  %v1075 = vpop.f32.mrb[0].mxu0
  %v1076 = vpop.f32.mrb[0].mxu0
  %v1077 = vadd.f32 %v997, %v1076
  %v1078 = vpop.f32.mrb[0].mxu0
  %1079 = vmatprep.mubr.bf16.mxu0 0
  %1080 = vmatmul.mubr.bf16.gmra.mrb[0].mxu0 %v175
  %v1081 = vpop.f32.mrb[0].mxu0
  %v1082 = vadd.f32 %v997, %v1081
  %v1083 = vpop.f32.mrb[0].mxu0
  %v1084 = vpop.f32.mrb[0].mxu0
  %v1085 = vadd.f32 %v997, %v1084
  %v1086 = vpop.f32.mrb[0].mxu0
  %1087 = vmatprep.mubr.bf16.mxu0 0
  %1088 = vmatmul.mubr.bf16.gmra.mrb[0].mxu0 %v176
  %v1089 = vpop.f32.mrb[0].mxu0
  %v1090 = vadd.f32 %v997, %v1089
  %v1091 = vpop.f32.mrb[0].mxu0
  %v1092 = vpop.f32.mrb[0].mxu0
  %v1093 = vadd.f32 %v997, %v1092
  %v1094 = vpop.f32.mrb[0].mxu0
  %1095 = vdwg.mxu0
  %1096 = vst [vmem:[%s4] sm:$0xff] %v1034
  %1097 = vst [vmem:[%s4 + $0x8] sm:$0xff] %v1037
  %1098 = vst [vmem:[%s4 + $0x10] sm:$0xff] %v1042
  %1099 = vst [vmem:[%s4 + $0x18] sm:$0xff] %v1045
  %1100 = vst [vmem:[%s4 + $0x20] sm:$0xff] %v1050
  %1101 = vst [vmem:[%s4 + $0x28] sm:$0xff] %v1053
  %1102 = vst [vmem:[%s4 + $0x30] sm:$0xff] %v1058
  %1103 = vst [vmem:[%s4 + $0x38] sm:$0xff] %v1061
  %1104 = vst [vmem:[%s4 + $0x40] sm:$0xff] %v1066
  %1105 = vst [vmem:[%s4 + $0x48] sm:$0xff] %v1069
  %1106 = vst [vmem:[%s4 + $0x50] sm:$0xff] %v1074
  %1107 = vst [vmem:[%s4 + $0x58] sm:$0xff] %v1077
  %1108 = vst [vmem:[%s4 + $0x60] sm:$0xff] %v1082
  %1109 = vst [vmem:[%s4 + $0x68] sm:$0xff] %v1085
  %1110 = vst [vmem:[%s4 + $0x70] sm:$0xff] %v1090
  %1111 = vst [vmem:[%s4 + $0x78] sm:$0xff] %v1093
  // Predicated region
  $region18: #{gcn_forward.1} parent=0 // pred_check
    _
  $region19: #{gcn_forward.1} parent=0 // pred_check_branch
    %1113 = sbr.rel (0) target = $region21
  $region20: #{gcn_forward.1} parent=0 // pred_region
    _
  $region21: #{gcn_forward.1} parent=0 // pred_fallthru
    _
  // Predicated region
  $region22: #{gcn_forward.1} parent=0 // pred_check
    _
  $region23: #{gcn_forward.1} parent=0 // pred_check_branch
    %1115 = sbr.rel (0) target = $region25
  $region24: #{gcn_forward.1} parent=0 // pred_region
    _
  $region25: #{gcn_forward.1} parent=0 // pred_fallthru
    _

</llo_original>
